<compile_context>
chip_gen: v7x
topology: tpu7x:2x2x1
jax: 0.10.0
libtpu: 0.0.40
codegen_flags: <defaults>
</compile_context>

<pallas_src>
import functools

import numpy as np
import jax
import jax.numpy as jnp
from jax import lax
from jax.experimental import pallas as pl
from jax.experimental.pallas import tpu as pltpu


def mlp_kernel(x_ref, w1_ref, b1_ref, w2t_ref, b2_ref, o_ref):
    # Per grid step:
    #   x_ref  : (6, TB)   streamed activation tile (features on sublanes,
    #                      batch on the 128-wide lane axis)
    #   w1_ref : (10, 6)   layer1 weight (torch (out, in) layout), VMEM-resident
    #   b1_ref : (10, 1)
    #   w2t_ref: (10, 2)   layer2 weight transposed to (in, out), VMEM-resident
    #   b2_ref : (2, 1)
    #   o_ref  : (2, TB)

    # ---- Layer 1 (6 -> 10) on the MXU: hT = relu(W1 @ xT + b1) ----
    h = jnp.dot(
        w1_ref[...], x_ref[...],
        preferred_element_type=jnp.float32,
        precision=lax.Precision.HIGHEST,
    )
    h = jnp.maximum(h + b1_ref[...], 0.0)                       # (10, TB)

    # ---- Layer 2 (10 -> 2) off the MXU ----
    # Only 2 output rows with K=10: on the MXU this streams mostly sublane
    # padding, so compute it as lane-broadcast multiplies (VPU) + a sublane
    # reduction (XLU); both units have slack next to the layer-1 matmul.
    w2t = w2t_ref[...]                                          # (10, 2)
    y0 = jnp.sum(h * w2t[:, 0:1], axis=0, keepdims=True)        # (1, TB)
    y1 = jnp.sum(h * w2t[:, 1:2], axis=0, keepdims=True)        # (1, TB)
    o_ref[...] = jnp.concatenate([y0, y1], axis=0) + b2_ref[...]


@functools.partial(jax.jit, static_argnames=("tb",))
def neural_network_forward_fm(xT, w1, b1, w2, b2, *, tb=None):
    """Feature-major forward (zero-copy path): xT (6, B) -> (2, B)."""
    f_in, B = xT.shape
    assert f_in == 6, "expected feature-major input of shape (6, B)"

    if tb is None:
        # At least 2 grid steps whenever B > 128 (megacore sharding of the
        # 'parallel' batch axis on v7x); cap the tile at 32K lanes so the
        # double-buffered (6,TB)/(2,TB) tiles plus the (10,TB) intermediates
        # stay well under the 32 MiB scoped VMEM we request (safe on
        # v5e / v6e / v7x).
        tb = min(32768, max(128, 128 * pl.cdiv(pl.cdiv(B, 128), 2)))
    n_tiles = pl.cdiv(B, tb)          # ragged last block; no batch padding

    b1_2d = b1.reshape(10, 1)
    b2_2d = b2.reshape(2, 1)
    w2t = w2.T                        # (10, 2); tiny one-time reshuffle

    cost = pl.CostEstimate(
        flops=2 * (6 * 10 + 10 * 2) * B,
        transcendentals=0,
        bytes_accessed=(6 + 2) * 4 * B + 4 * (10 * 6 + 10 + 10 * 2 + 2),
    )

    return pl.pallas_call(
        mlp_kernel,
        out_shape=jax.ShapeDtypeStruct((2, B), jnp.float32),
        grid=(n_tiles,),
        in_specs=[
            # streamed activations: one (6, TB) lane tile per grid step
            pl.BlockSpec((6, tb), lambda i: (0, i)),
            # parameters: full arrays, constant index -> VMEM-resident,
            # DMA'd once (do not change; lane-dense output + resident weights
            # are the correct structure per measured guidance)
            pl.BlockSpec((10, 6), lambda i: (0, 0)),
            pl.BlockSpec((10, 1), lambda i: (0, 0)),
            pl.BlockSpec((10, 2), lambda i: (0, 0)),
            pl.BlockSpec((2, 1), lambda i: (0, 0)),
        ],
        out_specs=pl.BlockSpec((2, tb), lambda i: (0, i)),
        compiler_params=pltpu.CompilerParams(
            dimension_semantics=("parallel",),
            vmem_limit_bytes=32 * 1024 * 1024,
        ),
        cost_estimate=cost,
    )(xT, w1, b1_2d, w2t, b2_2d)


@functools.partial(jax.jit, static_argnames=("tb",))
def neural_network_forward(x, w1, b1, w2, b2, *, tb=None):
    """Torch-module contract: x (B, 6) -> (B, 2).

    The transposes here exist only for parity with the PyTorch module's
    batch-major interface; the zero-copy production entry point is
    `neural_network_forward_fm` (feature-major I/O), which avoids the extra
    HBM read+write passes of `x.T` / `out.T`.
    """
    return neural_network_forward_fm(x.T, w1, b1, w2, b2, tb=tb).T


def init_params(key):
    """torch.nn.Linear-style init (U[-1/sqrt(fan_in), +1/sqrt(fan_in)]).

    Weights stored in torch layout: (out_features, in_features).
    """
    k1, k2, k3, k4 = jax.random.split(key, 4)
    bound1 = 1.0 / jnp.sqrt(6.0)
    bound2 = 1.0 / jnp.sqrt(10.0)
    w1 = jax.random.uniform(k1, (10, 6), jnp.float32, -bound1, bound1)
    b1 = jax.random.uniform(k2, (10,), jnp.float32, -bound1, bound1)
    w2 = jax.random.uniform(k3, (2, 10), jnp.float32, -bound2, bound2)
    b2 = jax.random.uniform(k4, (2,), jnp.float32, -bound2, bound2)
    return w1, b1, w2, b2


if __name__ == "__main__":
    key = jax.random.PRNGKey(0)
    k_x, k_p = jax.random.split(key)
    w1, b1, w2, b2 = init_params(k_p)

    # float64 host reference (exact same math as the PyTorch module)
    w1_np = np.asarray(w1, np.float64)
    b1_np = np.asarray(b1, np.float64)
    w2_np = np.asarray(w2, np.float64)
    b2_np = np.asarray(b2, np.float64)

    def ref_forward(x_np):
        h = np.maximum(x_np @ w1_np.T + b1_np, 0.0)
        return h @ w2_np.T + b2_np

    # small batch (single tile, ragged vs the 128-lane block)
    B = 8
    x = jax.random.normal(k_x, (B, 6), jnp.float32)
    y = jax.block_until_ready(neural_network_forward(x, w1, b1, w2, b2))
    assert y.shape == (B, 2)
    np.testing.assert_allclose(
        np.asarray(y), ref_forward(np.asarray(x, np.float64)), atol=1e-5, rtol=1e-4)

    # batch that is neither a multiple of 128 nor of the tile -> 2 grid steps,
    # ragged last block, exercises the 'parallel' batch axis.
    B2 = 300
    x2 = jax.random.normal(jax.random.PRNGKey(1), (B2, 6), jnp.float32)
    y2 = jax.block_until_ready(neural_network_forward(x2, w1, b1, w2, b2))
    assert y2.shape == (B2, 2)
    np.testing.assert_allclose(
        np.asarray(y2), ref_forward(np.asarray(x2, np.float64)), atol=1e-5, rtol=1e-4)

    # feature-major zero-copy entry point gives the same numbers
    y3 = jax.block_until_ready(neural_network_forward_fm(x2.T, w1, b1, w2, b2))
    assert y3.shape == (2, B2)
    np.testing.assert_allclose(np.asarray(y3.T), np.asarray(y2), atol=1e-6, rtol=1e-6)

    print("KERNEL_OK")
</pallas_src>

<mosaic_0001>
module attributes {stable_mosaic.version = 11 : i64} {
  func.func @mlp_kernel(%arg0: i32, %arg1: memref<6x128xf32, #tpu.memory_space<vmem>>, %arg2: memref<10x6xf32, #tpu.memory_space<vmem>>, %arg3: memref<10x1xf32, #tpu.memory_space<vmem>>, %arg4: memref<10x2xf32, #tpu.memory_space<vmem>>, %arg5: memref<2x1xf32, #tpu.memory_space<vmem>>, %arg6: memref<2x128xf32, #tpu.memory_space<vmem>>) attributes {dimension_semantics = [#tpu.dimension_semantics<parallel>], iteration_bounds = array<i64: 1>, scalar_prefetch = 0 : i64, scratch_operands = 0 : i64, tpu.core_type = #tpu.core_type<tc>, window_params = [{transform_indices = @transform_0, window_bounds = array<i64: 6, 128>}, {pipeline_mode = #tpu.pipeline_mode<synchronous>, transform_indices = @transform_1, window_bounds = array<i64: 10, 6>}, {pipeline_mode = #tpu.pipeline_mode<synchronous>, transform_indices = @transform_2, window_bounds = array<i64: 10, 1>}, {pipeline_mode = #tpu.pipeline_mode<synchronous>, transform_indices = @transform_3, window_bounds = array<i64: 10, 2>}, {pipeline_mode = #tpu.pipeline_mode<synchronous>, transform_indices = @transform_4, window_bounds = array<i64: 2, 1>}, {transform_indices = @transform_5, window_bounds = array<i64: 2, 128>}]} {
    %c0 = arith.constant 0 : index
    %c0_0 = arith.constant 0 : index
    %0 = vector.load %arg2[%c0, %c0_0] : memref<10x6xf32, #tpu.memory_space<vmem>>, vector<10x6xf32>
    %c0_1 = arith.constant 0 : index
    %c0_2 = arith.constant 0 : index
    %1 = vector.load %arg1[%c0_1, %c0_2] : memref<6x128xf32, #tpu.memory_space<vmem>>, vector<6x128xf32>
    %cst = arith.constant dense<0.000000e+00> : vector<10x128xf32>
    %2 = tpu.matmul %0, %1, %cst {dimension_numbers = #tpu.dot_dimension_numbers<[1], [0], [0], [1], [0, 0, 1, 1], [], []>, precision = #tpu.contract_precision<fp32>} : vector<10x6xf32>, vector<6x128xf32>, vector<10x128xf32> -> vector<10x128xf32>
    %c0_3 = arith.constant 0 : index
    %c0_4 = arith.constant 0 : index
    %3 = vector.load %arg3[%c0_3, %c0_4] : memref<10x1xf32, #tpu.memory_space<vmem>>, vector<10x1xf32>
    %4 = vector.broadcast %3 : vector<10x1xf32> to vector<10x128xf32>
    %5 = arith.addf %2, %4 : vector<10x128xf32>
    %cst_5 = arith.constant 0.000000e+00 : f32
    %6 = vector.broadcast %cst_5 : f32 to vector<10x128xf32>
    %7 = arith.maximumf %5, %6 : vector<10x128xf32>
    %c0_6 = arith.constant 0 : index
    %c0_7 = arith.constant 0 : index
    %8 = vector.load %arg4[%c0_6, %c0_7] : memref<10x2xf32, #tpu.memory_space<vmem>>, vector<10x2xf32>
    %9 = vector.extract_strided_slice %8 {offsets = [0, 0], sizes = [10, 1], strides = [1, 1]} : vector<10x2xf32> to vector<10x1xf32>
    %10 = vector.broadcast %9 : vector<10x1xf32> to vector<10x128xf32>
    %11 = arith.mulf %7, %10 : vector<10x128xf32>
    %cst_8 = arith.constant dense<0.000000e+00> : vector<128xf32>
    %12 = vector.multi_reduction <add>, %11, %cst_8 [0] : vector<10x128xf32> to vector<128xf32>
    %13 = vector.shape_cast %12 : vector<128xf32> to vector<1x128xf32>
    %14 = vector.extract_strided_slice %8 {offsets = [0, 1], sizes = [10, 1], strides = [1, 1]} : vector<10x2xf32> to vector<10x1xf32>
    %15 = vector.broadcast %14 : vector<10x1xf32> to vector<10x128xf32>
    %16 = arith.mulf %7, %15 : vector<10x128xf32>
    %cst_9 = arith.constant dense<0.000000e+00> : vector<128xf32>
    %17 = vector.multi_reduction <add>, %16, %cst_9 [0] : vector<10x128xf32> to vector<128xf32>
    %18 = vector.shape_cast %17 : vector<128xf32> to vector<1x128xf32>
    %19 = tpu.concatenate %13, %18 in 0 : vector<1x128xf32>, vector<1x128xf32> -> vector<2x128xf32>
    %c0_10 = arith.constant 0 : index
    %c0_11 = arith.constant 0 : index
    %20 = vector.load %arg5[%c0_10, %c0_11] : memref<2x1xf32, #tpu.memory_space<vmem>>, vector<2x1xf32>
    %21 = vector.broadcast %20 : vector<2x1xf32> to vector<2x128xf32>
    %22 = arith.addf %19, %21 : vector<2x128xf32>
    %c0_12 = arith.constant 0 : index
    %c0_13 = arith.constant 0 : index
    %23 = vector.load %arg6[%c0_12, %c0_13] : memref<2x128xf32, #tpu.memory_space<vmem>>, vector<2x128xf32>
    tpu.vector_store %arg6[%c0_12, %c0_13], %22 {strides = array<i32>} : memref<2x128xf32, #tpu.memory_space<vmem>>, vector<2x128xf32>,
    return
  }
  func.func @transform_0(%arg0: i32) -> (i32, i32) {
    %c0_i32 = arith.constant 0 : i32
    %c0_i32_0 = arith.constant 0 : i32
    return %c0_i32, %arg0 : i32, i32
  }
  func.func @transform_1(%arg0: i32) -> (i32, i32) {
    %c0_i32 = arith.constant 0 : i32
    %c0_i32_0 = arith.constant 0 : i32
    %c0_i32_1 = arith.constant 0 : i32
    return %c0_i32, %c0_i32_0 : i32, i32
  }
  func.func @transform_2(%arg0: i32) -> (i32, i32) {
    %c0_i32 = arith.constant 0 : i32
    %c0_i32_0 = arith.constant 0 : i32
    %c0_i32_1 = arith.constant 0 : i32
    return %c0_i32, %c0_i32_0 : i32, i32
  }
  func.func @transform_3(%arg0: i32) -> (i32, i32) {
    %c0_i32 = arith.constant 0 : i32
    %c0_i32_0 = arith.constant 0 : i32
    %c0_i32_1 = arith.constant 0 : i32
    return %c0_i32, %c0_i32_0 : i32, i32
  }
  func.func @transform_4(%arg0: i32) -> (i32, i32) {
    %c0_i32 = arith.constant 0 : i32
    %c0_i32_0 = arith.constant 0 : i32
    %c0_i32_1 = arith.constant 0 : i32
    return %c0_i32, %c0_i32_0 : i32, i32
  }
  func.func @transform_5(%arg0: i32) -> (i32, i32) {
    %c0_i32 = arith.constant 0 : i32
    %c0_i32_0 = arith.constant 0 : i32
    return %c0_i32, %arg0 : i32, i32
  }
}

</mosaic_0001>

<llo_original>
// kernel: neural_network_forward_fm.1
$region0: #{neural_network_forward_fm.1}
  #allocation0 [shape = 'u32[]', space=smem, size = 0x4, offset = 0x4, fixed_abs, tag = 'smem constant byte address 0x4 - core index']
  #allocation1 [shape = 'u32[144,128]{1,0:T(1,128)}', space=vmem, size = 0x12000, scoped, tag = 'internal scratch']
  %s0 = inlined_call_operand.vmem [shape: f32[6,8], index: 0, kind: input, shape index: {}]
  %s1 = inlined_call_operand.vmem [shape: f32[10,6], index: 1, kind: input, shape index: {}]
  %s2 = inlined_call_operand.vmem [shape: f32[10,1], index: 2, kind: input, shape index: {}]
  %s3 = inlined_call_operand.vmem [shape: f32[10,2], index: 3, kind: input, shape index: {}]
  %s4 = inlined_call_operand.vmem [shape: f32[2,1], index: 4, kind: input, shape index: {}]
  %s5 = inlined_call_operand.hbm [shape: f32[2,8], index: 5, kind: output, shape index: {}]
  %s6 = sld [smem:[#allocation0]]
  $region30: #{neural_network_forward_fm.1} parent=0
    _
  %s8 = ssub.s32 1, %s6
  %s9 = scalar_select 0, %s8, %s6
  $region1: #{neural_network_forward_fm.1} parent=0
    #allocation2 [shape = 'u8[1024]{0}', space=vmem, size = 0x400, scoped, tag = 'output window, operand 0, single buffered']
    #allocation3 [shape = 's32[1]{0}', space=sflag, size = 0x4, scoped, tag = 'scoped memory for neural_network_forward_fm.1']
    %10 = vsyncpa [#allocation3], 0
    // Predicated region
    $region2: #{neural_network_forward_fm.1} parent=1 // pred_check
      _
    $region3: #{neural_network_forward_fm.1} parent=1 // pred_check_branch
      %12 = sbr.rel (0) target = $region5
    $region4: #{neural_network_forward_fm.1} parent=1 // pred_region
      _
    $region5: #{neural_network_forward_fm.1} parent=1 // pred_fallthru
      _
    // Predicated region
    $region6: #{neural_network_forward_fm.1} parent=1 // pred_check
      _
    $region7: #{neural_network_forward_fm.1} parent=1 // pred_check_branch
      %14 = sbr.rel (0) target = $region9
    $region8: #{neural_network_forward_fm.1} parent=1 // pred_region
      _
    $region9: #{neural_network_forward_fm.1} parent=1 // pred_fallthru
      _
    // Predicated region
    $region10: #{neural_network_forward_fm.1} parent=1 // pred_check
      _
    $region11: #{neural_network_forward_fm.1} parent=1 // pred_check_branch
      %16 = sbr.rel (0) target = $region13
    $region12: #{neural_network_forward_fm.1} parent=1 // pred_region
      _
    $region13: #{neural_network_forward_fm.1} parent=1 // pred_fallthru
      _
    // Predicated region
    $region14: #{neural_network_forward_fm.1} parent=1 // pred_check
      _
    $region15: #{neural_network_forward_fm.1} parent=1 // pred_check_branch
      %18 = sbr.rel (0) target = $region17
    $region16: #{neural_network_forward_fm.1} parent=1 // pred_region
      _
    $region17: #{neural_network_forward_fm.1} parent=1 // pred_fallthru
      _
    // Predicated region
    $region18: #{neural_network_forward_fm.1} parent=1 // pred_check
      _
    $region19: #{neural_network_forward_fm.1} parent=1 // pred_check_branch
      %20 = sbr.rel (0) target = $region21
    $region20: #{neural_network_forward_fm.1} parent=1 // pred_region
      _
    $region21: #{neural_network_forward_fm.1} parent=1 // pred_fallthru
      _
    %v21 = vld [vmem:[%s1] sm:$0xff]
    %v22 = vld [vmem:[%s1 + $0x8] sm:$0x3]
    %v23 = vld [vmem:[%s0] sm:$0x3f]
    %v24 = vld [vmem:[%s2] sm:$0xff]
    %v25 = vld [vmem:[%s2 + $0x8] sm:$0x3]
    %27 = vset.pattern.permute.xlu0 0
    %28 = vperm.xlu0 %27, %v24
    %v29 = vpop.permute.xlu0 %28
    %32 = vset.pattern.permute.xlu0 0
    %33 = vperm.xlu0 %32, %v25
    %v34 = vpop.permute.xlu0 %33
    %vm36 = vcmask 48128
    %v38 = vsel %vm36, %v21, 0
    %v41 = vsel %vm36, %v22, 0
    %vm43 = vcmask 1045504
    %v45 = vsel %vm43, %v23, 0
    %47 = vmatprep.subr.mxu0 0.0
    %v48 = vand.u32 %v45, 4294901760
    %49 = vmatpush1.msra.mxu0 %v48
    %50 = vmatprep.subr.mxu0 0.0
    %51 = vmatpush1.msra.mxu0 0.0
    %52 = vmatprep.subr.mxu0 0.0
    %53 = vmatpush1.msra.mxu0 0.0
    %54 = vmatprep.subr.mxu0 0.0
    %55 = vmatpush1.msra.mxu0 0.0
    %56 = vmatprep.subr.mxu0 0.0
    %57 = vmatpush1.msra.mxu0 0.0
    %58 = vmatprep.subr.mxu0 0.0
    %59 = vmatpush1.msra.mxu0 0.0
    %60 = vmatprep.subr.mxu0 0.0
    %61 = vmatpush1.msra.mxu0 0.0
    %62 = vmatprep.subr.mxu0 0.0
    %63 = vmatpush1.msra.mxu0 0.0
    %64 = vmatprep.subr.mxu0 0.0
    %65 = vmatpush1.msra.mxu0 0.0
    %66 = vmatprep.subr.mxu0 0.0
    %67 = vmatpush1.msra.mxu0 0.0
    %68 = vmatprep.subr.mxu0 0.0
    %69 = vmatpush1.msra.mxu0 0.0
    %70 = vmatprep.subr.mxu0 0.0
    %71 = vmatpush1.msra.mxu0 0.0
    %72 = vmatprep.subr.mxu0 0.0
    %73 = vmatpush1.msra.mxu0 0.0
    %74 = vmatprep.subr.mxu0 0.0
    %75 = vmatpush1.msra.mxu0 0.0
    %76 = vmatprep.subr.mxu0 0.0
    %77 = vmatpush1.msra.mxu0 0.0
    %78 = vmatprep.subr.mxu0 0.0
    %79 = vmatpush1.msra.mxu0 0.0
    %80 = vmatprep.subr.mxu0 0.0
    %81 = vmatpush1.msra.mxu0 0.0
    %82 = vmatprep.subr.mxu0 0.0
    %83 = vmatpush1.msra.mxu0 0.0
    %84 = vmatprep.subr.mxu0 0.0
    %85 = vmatpush1.msra.mxu0 0.0
    %86 = vmatprep.subr.mxu0 0.0
    %87 = vmatpush1.msra.mxu0 0.0
    %88 = vmatprep.subr.mxu0 0.0
    %89 = vmatpush1.msra.mxu0 0.0
    %90 = vmatprep.subr.mxu0 0.0
    %91 = vmatpush1.msra.mxu0 0.0
    %92 = vmatprep.subr.mxu0 0.0
    %93 = vmatpush1.msra.mxu0 0.0
    %94 = vmatprep.subr.mxu0 0.0
    %95 = vmatpush1.msra.mxu0 0.0
    %96 = vmatprep.subr.mxu0 0.0
    %97 = vmatpush1.msra.mxu0 0.0
    %98 = vmatprep.subr.mxu0 0.0
    %99 = vmatpush1.msra.mxu0 0.0
    %100 = vmatprep.subr.mxu0 0.0
    %101 = vmatpush1.msra.mxu0 0.0
    %102 = vmatprep.subr.mxu0 0.0
    %103 = vmatpush1.msra.mxu0 0.0
    %104 = vmatprep.subr.mxu0 0.0
    %105 = vmatpush1.msra.mxu0 0.0
    %106 = vmatprep.subr.mxu0 0.0
    %107 = vmatpush1.msra.mxu0 0.0
    %108 = vmatprep.subr.mxu0 0.0
    %109 = vmatpush1.msra.mxu0 0.0
    %110 = vmatprep.subr.mxu0 0.0
    %111 = vmatpush1.msra.mxu0 0.0
    %112 = vmatprep.mubr.f32.mxu0 0.0
    %v113 = vand.u32 %v38, 4294901760
    %v114 = vsub.f32 %v38, %v113
    %v115 = vand.u32 %v114, 4294901760
    %v116 = vsub.f32 %v114, %v115
    %v117 = vand.u32 %v116, 4294901760
    %118 = vmatmul.mubr.f32.gmra.mrb[0].mxu0 %v117
    %v119 = vpop.f32.mrb[0].mxu0
    %v120 = vadd.f32 %v29, %v119
    %v121 = vpop.f32.mrb[0].mxu0
    %122 = vmatprep.mubr.f32.mxu0 0.0
    %v123 = vand.u32 %v41, 4294901760
    %v124 = vsub.f32 %v41, %v123
    %v125 = vand.u32 %v124, 4294901760
    %v126 = vsub.f32 %v124, %v125
    %v127 = vand.u32 %v126, 4294901760
    %128 = vmatmul.mubr.f32.gmra.mrb[0].mxu0 %v127
    %v129 = vpop.f32.mrb[0].mxu0
    %v130 = vadd.f32 %v34, %v129
    %v131 = vpop.f32.mrb[0].mxu0
    %132 = vdwg.mxu0
    %133 = vmatprep.subr.mxu0 0.0
    %v134 = vand.u32 %v45, 4294901760
    %v135 = vsub.f32 %v45, %v134
    %v136 = vand.u32 %v135, 4294901760
    %v137 = vsub.f32 %v135, %v136
    %v138 = vand.u32 %v137, 4294901760
    %139 = vmatpush1.msra.mxu0 %v138
    %140 = vmatprep.subr.mxu0 0.0
    %141 = vmatpush1.msra.mxu0 0.0
    %142 = vmatprep.subr.mxu0 0.0
    %143 = vmatpush1.msra.mxu0 0.0
    %144 = vmatprep.subr.mxu0 0.0
    %145 = vmatpush1.msra.mxu0 0.0
    %146 = vmatprep.subr.mxu0 0.0
    %147 = vmatpush1.msra.mxu0 0.0
    %148 = vmatprep.subr.mxu0 0.0
    %149 = vmatpush1.msra.mxu0 0.0
    %150 = vmatprep.subr.mxu0 0.0
    %151 = vmatpush1.msra.mxu0 0.0
    %152 = vmatprep.subr.mxu0 0.0
    %153 = vmatpush1.msra.mxu0 0.0
    %154 = vmatprep.subr.mxu0 0.0
    %155 = vmatpush1.msra.mxu0 0.0
    %156 = vmatprep.subr.mxu0 0.0
    %157 = vmatpush1.msra.mxu0 0.0
    %158 = vmatprep.subr.mxu0 0.0
    %159 = vmatpush1.msra.mxu0 0.0
    %160 = vmatprep.subr.mxu0 0.0
    %161 = vmatpush1.msra.mxu0 0.0
    %162 = vmatprep.subr.mxu0 0.0
    %163 = vmatpush1.msra.mxu0 0.0
    %164 = vmatprep.subr.mxu0 0.0
    %165 = vmatpush1.msra.mxu0 0.0
    %166 = vmatprep.subr.mxu0 0.0
    %167 = vmatpush1.msra.mxu0 0.0
    %168 = vmatprep.subr.mxu0 0.0
    %169 = vmatpush1.msra.mxu0 0.0
    %170 = vmatprep.subr.mxu0 0.0
    %171 = vmatpush1.msra.mxu0 0.0
    %172 = vmatprep.subr.mxu0 0.0
    %173 = vmatpush1.msra.mxu0 0.0
    %174 = vmatprep.subr.mxu0 0.0
    %175 = vmatpush1.msra.mxu0 0.0
    %176 = vmatprep.subr.mxu0 0.0
    %177 = vmatpush1.msra.mxu0 0.0
    %178 = vmatprep.subr.mxu0 0.0
    %179 = vmatpush1.msra.mxu0 0.0
    %180 = vmatprep.subr.mxu0 0.0
    %181 = vmatpush1.msra.mxu0 0.0
    %182 = vmatprep.subr.mxu0 0.0
    %183 = vmatpush1.msra.mxu0 0.0
    %184 = vmatprep.subr.mxu0 0.0
    %185 = vmatpush1.msra.mxu0 0.0
    %186 = vmatprep.subr.mxu0 0.0
    %187 = vmatpush1.msra.mxu0 0.0
    %188 = vmatprep.subr.mxu0 0.0
    %189 = vmatpush1.msra.mxu0 0.0
    %190 = vmatprep.subr.mxu0 0.0
    %191 = vmatpush1.msra.mxu0 0.0
    %192 = vmatprep.subr.mxu0 0.0
    %193 = vmatpush1.msra.mxu0 0.0
    %194 = vmatprep.subr.mxu0 0.0
    %195 = vmatpush1.msra.mxu0 0.0
    %196 = vmatprep.subr.mxu0 0.0
    %197 = vmatpush1.msra.mxu0 0.0
    %198 = vmatprep.subr.mxu0 0.0
    %199 = vmatpush1.msra.mxu0 0.0
    %200 = vmatprep.subr.mxu0 0.0
    %201 = vmatpush1.msra.mxu0 0.0
    %202 = vmatprep.mubr.f32.mxu0 0.0
    %v203 = vand.u32 %v38, 4294901760
    %204 = vmatmul.mubr.f32.gmra.mrb[0].mxu0 %v203
    %v205 = vpop.f32.mrb[0].mxu0
    %v206 = vadd.f32 %v120, %v205
    %v207 = vpop.f32.mrb[0].mxu0
    %208 = vmatprep.mubr.f32.mxu0 0.0
    %v209 = vand.u32 %v41, 4294901760
    %210 = vmatmul.mubr.f32.gmra.mrb[0].mxu0 %v209
    %v211 = vpop.f32.mrb[0].mxu0
    %v212 = vadd.f32 %v130, %v211
    %v213 = vpop.f32.mrb[0].mxu0
    %214 = vdwg.mxu0
    %215 = vmatprep.subr.mxu0 0.0
    %v216 = vand.u32 %v45, 4294901760
    %v217 = vsub.f32 %v45, %v216
    %218 = vmatpush1.msra.mxu0 %v217
    %219 = vmatprep.subr.mxu0 0.0
    %220 = vmatpush1.msra.mxu0 0.0
    %221 = vmatprep.subr.mxu0 0.0
    %222 = vmatpush1.msra.mxu0 0.0
    %223 = vmatprep.subr.mxu0 0.0
    %224 = vmatpush1.msra.mxu0 0.0
    %225 = vmatprep.subr.mxu0 0.0
    %226 = vmatpush1.msra.mxu0 0.0
    %227 = vmatprep.subr.mxu0 0.0
    %228 = vmatpush1.msra.mxu0 0.0
    %229 = vmatprep.subr.mxu0 0.0
    %230 = vmatpush1.msra.mxu0 0.0
    %231 = vmatprep.subr.mxu0 0.0
    %232 = vmatpush1.msra.mxu0 0.0
    %233 = vmatprep.subr.mxu0 0.0
    %234 = vmatpush1.msra.mxu0 0.0
    %235 = vmatprep.subr.mxu0 0.0
    %236 = vmatpush1.msra.mxu0 0.0
    %237 = vmatprep.subr.mxu0 0.0
    %238 = vmatpush1.msra.mxu0 0.0
    %239 = vmatprep.subr.mxu0 0.0
    %240 = vmatpush1.msra.mxu0 0.0
    %241 = vmatprep.subr.mxu0 0.0
    %242 = vmatpush1.msra.mxu0 0.0
    %243 = vmatprep.subr.mxu0 0.0
    %244 = vmatpush1.msra.mxu0 0.0
    %245 = vmatprep.subr.mxu0 0.0
    %246 = vmatpush1.msra.mxu0 0.0
    %247 = vmatprep.subr.mxu0 0.0
    %248 = vmatpush1.msra.mxu0 0.0
    %249 = vmatprep.subr.mxu0 0.0
    %250 = vmatpush1.msra.mxu0 0.0
    %251 = vmatprep.subr.mxu0 0.0
    %252 = vmatpush1.msra.mxu0 0.0
    %253 = vmatprep.subr.mxu0 0.0
    %254 = vmatpush1.msra.mxu0 0.0
    %255 = vmatprep.subr.mxu0 0.0
    %256 = vmatpush1.msra.mxu0 0.0
    %257 = vmatprep.subr.mxu0 0.0
    %258 = vmatpush1.msra.mxu0 0.0
    %259 = vmatprep.subr.mxu0 0.0
    %260 = vmatpush1.msra.mxu0 0.0
    %261 = vmatprep.subr.mxu0 0.0
    %262 = vmatpush1.msra.mxu0 0.0
    %263 = vmatprep.subr.mxu0 0.0
    %264 = vmatpush1.msra.mxu0 0.0
    %265 = vmatprep.subr.mxu0 0.0
    %266 = vmatpush1.msra.mxu0 0.0
    %267 = vmatprep.subr.mxu0 0.0
    %268 = vmatpush1.msra.mxu0 0.0
    %269 = vmatprep.subr.mxu0 0.0
    %270 = vmatpush1.msra.mxu0 0.0
    %271 = vmatprep.subr.mxu0 0.0
    %272 = vmatpush1.msra.mxu0 0.0
    %273 = vmatprep.subr.mxu0 0.0
    %274 = vmatpush1.msra.mxu0 0.0
    %275 = vmatprep.subr.mxu0 0.0
    %276 = vmatpush1.msra.mxu0 0.0
    %277 = vmatprep.subr.mxu0 0.0
    %278 = vmatpush1.msra.mxu0 0.0
    %279 = vmatprep.subr.mxu0 0.0
    %280 = vmatpush1.msra.mxu0 0.0
    %281 = vmatprep.mubr.f32.mxu0 0.0
    %v282 = vand.u32 %v38, 4294901760
    %v283 = vsub.f32 %v38, %v282
    %284 = vmatmul.mubr.f32.gmra.mrb[0].mxu0 %v283
    %v285 = vpop.f32.mrb[0].mxu0
    %v286 = vadd.f32 %v206, %v285
    %v287 = vpop.f32.mrb[0].mxu0
    %288 = vmatprep.mubr.f32.mxu0 0.0
    %v289 = vand.u32 %v41, 4294901760
    %v290 = vsub.f32 %v41, %v289
    %291 = vmatmul.mubr.f32.gmra.mrb[0].mxu0 %v290
    %v292 = vpop.f32.mrb[0].mxu0
    %v293 = vadd.f32 %v212, %v292
    %v294 = vpop.f32.mrb[0].mxu0
    %295 = vdwg.mxu0
    %296 = vmatprep.subr.mxu0 0.0
    %v297 = vand.u32 %v45, 4294901760
    %298 = vmatpush1.msra.mxu0 %v297
    %299 = vmatprep.subr.mxu0 0.0
    %300 = vmatpush1.msra.mxu0 0.0
    %301 = vmatprep.subr.mxu0 0.0
    %302 = vmatpush1.msra.mxu0 0.0
    %303 = vmatprep.subr.mxu0 0.0
    %304 = vmatpush1.msra.mxu0 0.0
    %305 = vmatprep.subr.mxu0 0.0
    %306 = vmatpush1.msra.mxu0 0.0
    %307 = vmatprep.subr.mxu0 0.0
    %308 = vmatpush1.msra.mxu0 0.0
    %309 = vmatprep.subr.mxu0 0.0
    %310 = vmatpush1.msra.mxu0 0.0
    %311 = vmatprep.subr.mxu0 0.0
    %312 = vmatpush1.msra.mxu0 0.0
    %313 = vmatprep.subr.mxu0 0.0
    %314 = vmatpush1.msra.mxu0 0.0
    %315 = vmatprep.subr.mxu0 0.0
    %316 = vmatpush1.msra.mxu0 0.0
    %317 = vmatprep.subr.mxu0 0.0
    %318 = vmatpush1.msra.mxu0 0.0
    %319 = vmatprep.subr.mxu0 0.0
    %320 = vmatpush1.msra.mxu0 0.0
    %321 = vmatprep.subr.mxu0 0.0
    %322 = vmatpush1.msra.mxu0 0.0
    %323 = vmatprep.subr.mxu0 0.0
    %324 = vmatpush1.msra.mxu0 0.0
    %325 = vmatprep.subr.mxu0 0.0
    %326 = vmatpush1.msra.mxu0 0.0
    %327 = vmatprep.subr.mxu0 0.0
    %328 = vmatpush1.msra.mxu0 0.0
    %329 = vmatprep.subr.mxu0 0.0
    %330 = vmatpush1.msra.mxu0 0.0
    %331 = vmatprep.subr.mxu0 0.0
    %332 = vmatpush1.msra.mxu0 0.0
    %333 = vmatprep.subr.mxu0 0.0
    %334 = vmatpush1.msra.mxu0 0.0
    %335 = vmatprep.subr.mxu0 0.0
    %336 = vmatpush1.msra.mxu0 0.0
    %337 = vmatprep.subr.mxu0 0.0
    %338 = vmatpush1.msra.mxu0 0.0
    %339 = vmatprep.subr.mxu0 0.0
    %340 = vmatpush1.msra.mxu0 0.0
    %341 = vmatprep.subr.mxu0 0.0
    %342 = vmatpush1.msra.mxu0 0.0
    %343 = vmatprep.subr.mxu0 0.0
    %344 = vmatpush1.msra.mxu0 0.0
    %345 = vmatprep.subr.mxu0 0.0
    %346 = vmatpush1.msra.mxu0 0.0
    %347 = vmatprep.subr.mxu0 0.0
    %348 = vmatpush1.msra.mxu0 0.0
    %349 = vmatprep.subr.mxu0 0.0
    %350 = vmatpush1.msra.mxu0 0.0
    %351 = vmatprep.subr.mxu0 0.0
    %352 = vmatpush1.msra.mxu0 0.0
    %353 = vmatprep.subr.mxu0 0.0
    %354 = vmatpush1.msra.mxu0 0.0
    %355 = vmatprep.subr.mxu0 0.0
    %356 = vmatpush1.msra.mxu0 0.0
    %357 = vmatprep.subr.mxu0 0.0
    %358 = vmatpush1.msra.mxu0 0.0
    %359 = vmatprep.subr.mxu0 0.0
    %360 = vmatpush1.msra.mxu0 0.0
    %361 = vmatprep.mubr.f32.mxu0 0.0
    %v362 = vand.u32 %v38, 4294901760
    %v363 = vsub.f32 %v38, %v362
    %v364 = vand.u32 %v363, 4294901760
    %365 = vmatmul.mubr.f32.gmra.mrb[0].mxu0 %v364
    %v366 = vpop.f32.mrb[0].mxu0
    %v367 = vadd.f32 %v286, %v366
    %v368 = vpop.f32.mrb[0].mxu0
    %369 = vmatprep.mubr.f32.mxu0 0.0
    %v370 = vand.u32 %v41, 4294901760
    %v371 = vsub.f32 %v41, %v370
    %v372 = vand.u32 %v371, 4294901760
    %373 = vmatmul.mubr.f32.gmra.mrb[0].mxu0 %v372
    %v374 = vpop.f32.mrb[0].mxu0
    %v375 = vadd.f32 %v293, %v374
    %v376 = vpop.f32.mrb[0].mxu0
    %377 = vdwg.mxu0
    %378 = vmatprep.subr.mxu0 0.0
    %v379 = vand.u32 %v45, 4294901760
    %v380 = vsub.f32 %v45, %v379
    %v381 = vand.u32 %v380, 4294901760
    %382 = vmatpush1.msra.mxu0 %v381
    %383 = vmatprep.subr.mxu0 0.0
    %384 = vmatpush1.msra.mxu0 0.0
    %385 = vmatprep.subr.mxu0 0.0
    %386 = vmatpush1.msra.mxu0 0.0
    %387 = vmatprep.subr.mxu0 0.0
    %388 = vmatpush1.msra.mxu0 0.0
    %389 = vmatprep.subr.mxu0 0.0
    %390 = vmatpush1.msra.mxu0 0.0
    %391 = vmatprep.subr.mxu0 0.0
    %392 = vmatpush1.msra.mxu0 0.0
    %393 = vmatprep.subr.mxu0 0.0
    %394 = vmatpush1.msra.mxu0 0.0
    %395 = vmatprep.subr.mxu0 0.0
    %396 = vmatpush1.msra.mxu0 0.0
    %397 = vmatprep.subr.mxu0 0.0
    %398 = vmatpush1.msra.mxu0 0.0
    %399 = vmatprep.subr.mxu0 0.0
    %400 = vmatpush1.msra.mxu0 0.0
    %401 = vmatprep.subr.mxu0 0.0
    %402 = vmatpush1.msra.mxu0 0.0
    %403 = vmatprep.subr.mxu0 0.0
    %404 = vmatpush1.msra.mxu0 0.0
    %405 = vmatprep.subr.mxu0 0.0
    %406 = vmatpush1.msra.mxu0 0.0
    %407 = vmatprep.subr.mxu0 0.0
    %408 = vmatpush1.msra.mxu0 0.0
    %409 = vmatprep.subr.mxu0 0.0
    %410 = vmatpush1.msra.mxu0 0.0
    %411 = vmatprep.subr.mxu0 0.0
    %412 = vmatpush1.msra.mxu0 0.0
    %413 = vmatprep.subr.mxu0 0.0
    %414 = vmatpush1.msra.mxu0 0.0
    %415 = vmatprep.subr.mxu0 0.0
    %416 = vmatpush1.msra.mxu0 0.0
    %417 = vmatprep.subr.mxu0 0.0
    %418 = vmatpush1.msra.mxu0 0.0
    %419 = vmatprep.subr.mxu0 0.0
    %420 = vmatpush1.msra.mxu0 0.0
    %421 = vmatprep.subr.mxu0 0.0
    %422 = vmatpush1.msra.mxu0 0.0
    %423 = vmatprep.subr.mxu0 0.0
    %424 = vmatpush1.msra.mxu0 0.0
    %425 = vmatprep.subr.mxu0 0.0
    %426 = vmatpush1.msra.mxu0 0.0
    %427 = vmatprep.subr.mxu0 0.0
    %428 = vmatpush1.msra.mxu0 0.0
    %429 = vmatprep.subr.mxu0 0.0
    %430 = vmatpush1.msra.mxu0 0.0
    %431 = vmatprep.subr.mxu0 0.0
    %432 = vmatpush1.msra.mxu0 0.0
    %433 = vmatprep.subr.mxu0 0.0
    %434 = vmatpush1.msra.mxu0 0.0
    %435 = vmatprep.subr.mxu0 0.0
    %436 = vmatpush1.msra.mxu0 0.0
    %437 = vmatprep.subr.mxu0 0.0
    %438 = vmatpush1.msra.mxu0 0.0
    %439 = vmatprep.subr.mxu0 0.0
    %440 = vmatpush1.msra.mxu0 0.0
    %441 = vmatprep.subr.mxu0 0.0
    %442 = vmatpush1.msra.mxu0 0.0
    %443 = vmatprep.subr.mxu0 0.0
    %444 = vmatpush1.msra.mxu0 0.0
    %445 = vmatprep.mubr.f32.mxu0 0.0
    %v446 = vand.u32 %v38, 4294901760
    %447 = vmatmul.mubr.f32.gmra.mrb[0].mxu0 %v446
    %v448 = vpop.f32.mrb[0].mxu0
    %v449 = vadd.f32 %v367, %v448
    %v450 = vpop.f32.mrb[0].mxu0
    %451 = vmatprep.mubr.f32.mxu0 0.0
    %v452 = vand.u32 %v41, 4294901760
    %453 = vmatmul.mubr.f32.gmra.mrb[0].mxu0 %v452
    %v454 = vpop.f32.mrb[0].mxu0
    %v455 = vadd.f32 %v375, %v454
    %v456 = vpop.f32.mrb[0].mxu0
    %457 = vdwg.mxu0
    %458 = vmatprep.subr.mxu0 0.0
    %v459 = vand.u32 %v45, 4294901760
    %460 = vmatpush1.msra.mxu0 %v459
    %461 = vmatprep.subr.mxu0 0.0
    %462 = vmatpush1.msra.mxu0 0.0
    %463 = vmatprep.subr.mxu0 0.0
    %464 = vmatpush1.msra.mxu0 0.0
    %465 = vmatprep.subr.mxu0 0.0
    %466 = vmatpush1.msra.mxu0 0.0
    %467 = vmatprep.subr.mxu0 0.0
    %468 = vmatpush1.msra.mxu0 0.0
    %469 = vmatprep.subr.mxu0 0.0
    %470 = vmatpush1.msra.mxu0 0.0
    %471 = vmatprep.subr.mxu0 0.0
    %472 = vmatpush1.msra.mxu0 0.0
    %473 = vmatprep.subr.mxu0 0.0
    %474 = vmatpush1.msra.mxu0 0.0
    %475 = vmatprep.subr.mxu0 0.0
    %476 = vmatpush1.msra.mxu0 0.0
    %477 = vmatprep.subr.mxu0 0.0
    %478 = vmatpush1.msra.mxu0 0.0
    %479 = vmatprep.subr.mxu0 0.0
    %480 = vmatpush1.msra.mxu0 0.0
    %481 = vmatprep.subr.mxu0 0.0
    %482 = vmatpush1.msra.mxu0 0.0
    %483 = vmatprep.subr.mxu0 0.0
    %484 = vmatpush1.msra.mxu0 0.0
    %485 = vmatprep.subr.mxu0 0.0
    %486 = vmatpush1.msra.mxu0 0.0
    %487 = vmatprep.subr.mxu0 0.0
    %488 = vmatpush1.msra.mxu0 0.0
    %489 = vmatprep.subr.mxu0 0.0
    %490 = vmatpush1.msra.mxu0 0.0
    %491 = vmatprep.subr.mxu0 0.0
    %492 = vmatpush1.msra.mxu0 0.0
    %493 = vmatprep.subr.mxu0 0.0
    %494 = vmatpush1.msra.mxu0 0.0
    %495 = vmatprep.subr.mxu0 0.0
    %496 = vmatpush1.msra.mxu0 0.0
    %497 = vmatprep.subr.mxu0 0.0
    %498 = vmatpush1.msra.mxu0 0.0
    %499 = vmatprep.subr.mxu0 0.0
    %500 = vmatpush1.msra.mxu0 0.0
    %501 = vmatprep.subr.mxu0 0.0
    %502 = vmatpush1.msra.mxu0 0.0
    %503 = vmatprep.subr.mxu0 0.0
    %504 = vmatpush1.msra.mxu0 0.0
    %505 = vmatprep.subr.mxu0 0.0
    %506 = vmatpush1.msra.mxu0 0.0
    %507 = vmatprep.subr.mxu0 0.0
    %508 = vmatpush1.msra.mxu0 0.0
    %509 = vmatprep.subr.mxu0 0.0
    %510 = vmatpush1.msra.mxu0 0.0
    %511 = vmatprep.subr.mxu0 0.0
    %512 = vmatpush1.msra.mxu0 0.0
    %513 = vmatprep.subr.mxu0 0.0
    %514 = vmatpush1.msra.mxu0 0.0
    %515 = vmatprep.subr.mxu0 0.0
    %516 = vmatpush1.msra.mxu0 0.0
    %517 = vmatprep.subr.mxu0 0.0
    %518 = vmatpush1.msra.mxu0 0.0
    %519 = vmatprep.subr.mxu0 0.0
    %520 = vmatpush1.msra.mxu0 0.0
    %521 = vmatprep.subr.mxu0 0.0
    %522 = vmatpush1.msra.mxu0 0.0
    %523 = vmatprep.mubr.f32.mxu0 0.0
    %v524 = vand.u32 %v38, 4294901760
    %525 = vmatmul.mubr.f32.gmra.mrb[0].mxu0 %v524
    %v526 = vpop.f32.mrb[0].mxu0
    %v527 = vadd.f32 %v449, %v526
    %v528 = vpop.f32.mrb[0].mxu0
    %529 = vmatprep.mubr.f32.mxu0 0.0
    %v530 = vand.u32 %v41, 4294901760
    %531 = vmatmul.mubr.f32.gmra.mrb[0].mxu0 %v530
    %v532 = vpop.f32.mrb[0].mxu0
    %v533 = vadd.f32 %v455, %v532
    %v534 = vpop.f32.mrb[0].mxu0
    %535 = vdwg.mxu0
    %v536 = vmax.f32 %v527, 0.0
    %v537 = vmax.f32 %v533, 0.0
    %v538 = vld [vmem:[%s3] sm:$0xff]
    %v539 = vld [vmem:[%s3 + $0x8] sm:$0x3]
    %541 = vset.pattern.permute.xlu0 0
    %542 = vperm.xlu0 %541, %v538
    %v543 = vpop.permute.xlu0 %542
    %546 = vset.pattern.permute.xlu0 0
    %547 = vperm.xlu0 %546, %v539
    %v548 = vpop.permute.xlu0 %547
    %v550 = vmul.f32 %v536, %v543
    %v551 = vmul.f32 %v537, %v548
    %vm552 = vcmask 1041408
    %v553 = vsel %vm552, %v551, 0.0
    %v554 = vadd.f32 %v550, %v553
    %v555 = vrot.slane %v554, 4
    %v556 = vadd.f32 %v554, %v555
    %v557 = vrot.slane %v556, 2
    %v558 = vadd.f32 %v556, %v557
    %v559 = vrot.slane %v558, 1
    %v560 = vadd.f32 %v558, %v559
    %561 = vset.pattern.permute.xlu0 1
    %562 = vperm.xlu0 %561, %v538
    %v563 = vpop.permute.xlu0 %562
    %565 = vset.pattern.permute.xlu0 1
    %566 = vperm.xlu0 %565, %v539
    %v567 = vpop.permute.xlu0 %566
    %v569 = vmul.f32 %v536, %v563
    %v570 = vmul.f32 %v537, %v567
    %v571 = vsel %vm552, %v570, 0.0
    %v572 = vadd.f32 %v569, %v571
    %v573 = vrot.slane %v572, 4
    %v574 = vadd.f32 %v572, %v573
    %v575 = vrot.slane %v574, 2
    %v576 = vadd.f32 %v574, %v575
    %v577 = vrot.slane %v576, 1
    %v578 = vadd.f32 %v576, %v577
    %vm579 = vcmask 1040384
    %v580 = vsel %vm579, %v560, %v578
    %v581 = vld [vmem:[%s4] sm:$0x3]
    %583 = vset.pattern.permute.xlu0 0
    %584 = vperm.xlu0 %583, %v581
    %v585 = vpop.permute.xlu0 %584
    %v587 = vadd.f32 %v580, %v585
    %588 = vst [vmem:[#allocation2] sm:$0x3] %v587
    // Predicated region
    $region22: #{neural_network_forward_fm.1} parent=1 // pred_check
      _
    $region23: #{neural_network_forward_fm.1} parent=1 // pred_check_branch
      %590 = sbr.rel (0) target = $region25
    $region24: #{neural_network_forward_fm.1} parent=1 // pred_region
      %s592 = ssub.s32 32, 32
      %593 = vsyncadd [#allocation3], %s592
      %s595 = sshll.u32 [#allocation2], 4
      %s596 = int_to_ptr.vmem [resolvable:$true] %s595
      %598 = dma.vmem_to_hbm [thread:$0]  %s596, 32, %s5, [#allocation3]
    $region25: #{neural_network_forward_fm.1} parent=1 // pred_fallthru
      _
    // Predicated region
    $region26: #{neural_network_forward_fm.1} parent=1 // pred_check
      _
    $region27: #{neural_network_forward_fm.1} parent=1 // pred_check_branch
      %600 = sbr.rel (0) target = $region29
    $region28: #{neural_network_forward_fm.1} parent=1 // pred_region
      %601 = dma.done [#allocation3], 32
    $region29: #{neural_network_forward_fm.1} parent=1 // pred_fallthru
      _
    %602 = vsyncpa [#allocation3], 1

</llo_original>
